<compile_context>
chip_gen: v6e
topology: v6e:2x2x1
jax: 0.10.0
libtpu: 0.0.40
codegen_flags: <defaults>
</compile_context>

<pallas_src>
import numpy as np
import jax
import jax.numpy as jnp
from jax.experimental import pallas as pl
from jax.experimental.pallas import tpu as pltpu


def _round_up(x, m):
    return (x + m - 1) // m * m


def _dft2_matrices(h, w):
    """Fused forward 2-D DFT matrix (kron of 1-D DFTs), real/imag parts, f32.

    F2 is symmetric, so for row-major flattened x:
        fft2(x).flatten()  == x.flatten() @ F2
        ifft2(z).flatten() == z.flatten() @ conj(F2) / (h*w)
    """
    kh = np.arange(h)
    kw = np.arange(w)
    fh = np.exp(-2j * np.pi * np.outer(kh, kh) / h)
    fw = np.exp(-2j * np.pi * np.outer(kw, kw) / w)
    f2 = np.kron(fh, fw)
    return (jnp.asarray(f2.real, dtype=jnp.float32),
            jnp.asarray(f2.imag, dtype=jnp.float32))


def _make_kernel(C, b_tile):
    """Kernel over one batch tile.

    w_ref  : SMEM (2*C*C,)  conv weights, prescaled by 1/(H*W)
    b_ref  : SMEM (2*C,)    conv biases,  prescaled by 1/(H*W)
    x_ref  : VMEM (1, 2*C*b_tile, HW)   rows ordered (modality, channel, batch)
    fr/fi  : VMEM (HW, HW)  real / imag parts of the fused forward 2-D DFT
    out_ref: VMEM (1, C*b_tile, HW)     rows ordered (channel, batch)
    """
    def kernel(w_ref, b_ref, x_ref, fr_ref, fi_ref, out_ref):
        x = x_ref[0]                                       # (2*C*b_tile, HW)
        fr = fr_ref[...]
        fi = fi_ref[...]

        # Fused forward 2-D DFT: two lane-dense MXU matmuls, M = 2*C*b_tile.
        yr = jnp.dot(x, fr, preferred_element_type=jnp.float32)
        yi = jnp.dot(x, fi, preferred_element_type=jnp.float32)

        # Per output channel: build the ReLU(1x1 conv) gate with unrolled VPU
        # broadcast-FMAs on aligned (b_tile, HW) slabs, gate the spectrum, and
        # fold the two modalities (ifft2 is linear) before the inverse DFT.
        zr_parts = []
        zi_parts = []
        for o in range(C):
            zr_o = None
            zi_o = None
            for m in range(2):
                row = m * C + o
                acc = x[(m * C) * b_tile:(m * C + 1) * b_tile] * w_ref[row * C]
                for ci in range(1, C):
                    src = x[(m * C + ci) * b_tile:(m * C + ci + 1) * b_tile]
                    acc = acc + src * w_ref[row * C + ci]
                gate = jnp.maximum(acc + b_ref[row], 0.0)   # already / (H*W)
                sl = slice(row * b_tile, (row + 1) * b_tile)
                tr = yr[sl] * gate
                ti = yi[sl] * gate
                zr_o = tr if zr_o is None else zr_o + tr
                zi_o = ti if zi_o is None else zi_o + ti
            zr_parts.append(zr_o)
            zi_parts.append(zi_o)

        zr = jnp.concatenate(zr_parts, axis=0)              # (C*b_tile, HW)
        zi = jnp.concatenate(zi_parts, axis=0)

        # Inverse 2-D DFT, real part: (zr@Fr + zi@Fi); 1/(H*W) folded into w,b.
        out_ref[0] = (jnp.dot(zr, fr, preferred_element_type=jnp.float32)
                      + jnp.dot(zi, fi, preferred_element_type=jnp.float32))
    return kernel


def parallel_filter_fusion(hsi, sar, w_hsi, b_hsi, w_sar, b_sar):
    N, C, H, W = hsi.shape
    assert sar.shape == (N, C, H, W)
    HW = H * W
    fr, fi = _dft2_matrices(H, W)

    # Batch tile: target 256 MXU rows (= 2*C*B_TILE) per grid step, multiple
    # of 8 for sublane alignment, capped by the (padded) batch.  Large batches
    # naturally give >=2 grid steps so v7x's two TensorCores both get work.
    b_tile = max(8, (256 // (2 * C)) // 8 * 8)
    b_tile = min(b_tile, _round_up(N, 8))
    n_pad = _round_up(N, b_tile)
    steps = n_pad // b_tile
    rows_in = 2 * C * b_tile
    rows_out = C * b_tile

    # Rows ordered (modality, channel, batch-within-tile): lane-dense HW last,
    # each (modality, channel) owns an aligned (b_tile, HW) slab.
    x = jnp.stack([hsi, sar], axis=0).astype(jnp.float32).reshape(2, N, C, HW)
    x = jnp.transpose(x, (0, 2, 1, 3))                      # (2, C, N, HW)
    x = jnp.pad(x, ((0, 0), (0, 0), (0, n_pad - N), (0, 0)))
    x = x.reshape(2, C, steps, b_tile, HW)
    x = jnp.transpose(x, (2, 0, 1, 3, 4)).reshape(steps, rows_in, HW)

    # Fold the ifft2 1/(H*W) normalisation into the conv weights/bias
    # (ReLU is positively homogeneous); gr/gi matrices are then not needed.
    inv = jnp.float32(1.0 / HW)
    w_flat = (jnp.concatenate([w_hsi.reshape(-1), w_sar.reshape(-1)])
              .astype(jnp.float32) * inv)                   # (2*C*C,)
    b_flat = (jnp.concatenate([b_hsi.reshape(-1), b_sar.reshape(-1)])
              .astype(jnp.float32) * inv)                   # (2*C,)

    kernel = _make_kernel(C, b_tile)
    smem_spec = pl.BlockSpec(memory_space=pltpu.MemorySpace.SMEM)

    out = pl.pallas_call(
        kernel,
        out_shape=jax.ShapeDtypeStruct((steps, rows_out, HW), jnp.float32),
        grid=(steps,),
        in_specs=[smem_spec, smem_spec,
                  pl.BlockSpec((1, rows_in, HW), lambda n: (n, 0, 0)),
                  pl.BlockSpec((HW, HW), lambda n: (0, 0)),
                  pl.BlockSpec((HW, HW), lambda n: (0, 0))],
        out_specs=pl.BlockSpec((1, rows_out, HW), lambda n: (n, 0, 0)),
        compiler_params=pltpu.CompilerParams(
            dimension_semantics=("parallel",)),
    )(w_flat, b_flat, x, fr, fi)

    # (steps, C*b_tile, HW) -> (N, C, H, W)
    out = out.reshape(steps, C, b_tile, HW)
    out = jnp.transpose(out, (0, 2, 1, 3)).reshape(n_pad, C, HW)[:N]
    return out.reshape(N, C, H, W)


def reference(hsi, sar, w_hsi, b_hsi, w_sar, b_sar):
    """Pure-JAX reference replicating the PyTorch forward."""
    def filt(x, w, b):
        g = jax.nn.relu(jnp.einsum('oi,nihw->nohw', w, x)
                        + b[None, :, None, None])
        xf = jnp.fft.fft2(x)
        return jnp.real(jnp.fft.ifft2(xf * g))
    return filt(hsi, w_hsi, b_hsi) + filt(sar, w_sar, b_sar)


if __name__ == "__main__":
    # The reference forward adds the two filtered streams, which forces
    # hsi_channels == sar_channels; use 4 for both.
    N, C, H, W = 2, 4, 16, 16
    key = jax.random.PRNGKey(0)
    k1, k2, k3, k4, k5, k6 = jax.random.split(key, 6)

    hsi = jax.random.normal(k1, (N, C, H, W), jnp.float32)
    sar = jax.random.normal(k2, (N, C, H, W), jnp.float32)

    bound = 1.0 / np.sqrt(C)   # PyTorch default Conv2d init range
    w_hsi = jax.random.uniform(k3, (C, C), jnp.float32, -bound, bound)
    b_hsi = jax.random.uniform(k4, (C,), jnp.float32, -bound, bound)
    w_sar = jax.random.uniform(k5, (C, C), jnp.float32, -bound, bound)
    b_sar = jax.random.uniform(k6, (C,), jnp.float32, -bound, bound)

    out = parallel_filter_fusion(hsi, sar, w_hsi, b_hsi, w_sar, b_sar)
    out = jax.block_until_ready(out)

    ref = reference(hsi, sar, w_hsi, b_hsi, w_sar, b_sar)
    np.testing.assert_allclose(np.asarray(out), np.asarray(ref),
                               rtol=2e-3, atol=2e-3)
    print("KERNEL_OK")
</pallas_src>

<mosaic_0001>
module attributes {stable_mosaic.version = 11 : i64} {
  func.func @kernel(%arg0: i32, %arg1: memref<32xf32, #tpu.memory_space<smem>>, %arg2: memref<8xf32, #tpu.memory_space<smem>>, %arg3: memref<1x64x256xf32, #tpu.memory_space<vmem>>, %arg4: memref<256x256xf32, #tpu.memory_space<vmem>>, %arg5: memref<256x256xf32, #tpu.memory_space<vmem>>, %arg6: memref<1x32x256xf32, #tpu.memory_space<vmem>>) attributes {dimension_semantics = [#tpu.dimension_semantics<parallel>], iteration_bounds = array<i64: 1>, scalar_prefetch = 0 : i64, scratch_operands = 0 : i64, tpu.core_type = #tpu.core_type<tc>, window_params = [{transform_indices = @transform_0, window_bounds = array<i64: 32>}, {transform_indices = @transform_1, window_bounds = array<i64: 8>}, {transform_indices = @transform_2, window_bounds = array<i64: 1, 64, 256>}, {pipeline_mode = #tpu.pipeline_mode<synchronous>, transform_indices = @transform_3, window_bounds = array<i64: 256, 256>}, {pipeline_mode = #tpu.pipeline_mode<synchronous>, transform_indices = @transform_4, window_bounds = array<i64: 256, 256>}, {transform_indices = @transform_5, window_bounds = array<i64: 1, 32, 256>}]} {
    %c0 = arith.constant 0 : index
    %c0_0 = arith.constant 0 : index
    %c0_1 = arith.constant 0 : index
    %0 = vector.load %arg3[%c0, %c0_0, %c0_1] : memref<1x64x256xf32, #tpu.memory_space<vmem>>, vector<1x64x256xf32>
    %1 = vector.shape_cast %0 : vector<1x64x256xf32> to vector<64x256xf32>
    %c0_2 = arith.constant 0 : index
    %c0_3 = arith.constant 0 : index
    %2 = vector.load %arg4[%c0_2, %c0_3] : memref<256x256xf32, #tpu.memory_space<vmem>>, vector<256x256xf32>
    %c0_4 = arith.constant 0 : index
    %c0_5 = arith.constant 0 : index
    %3 = vector.load %arg5[%c0_4, %c0_5] : memref<256x256xf32, #tpu.memory_space<vmem>>, vector<256x256xf32>
    %cst = arith.constant dense<0.000000e+00> : vector<64x256xf32>
    %4 = tpu.matmul %1, %2, %cst {dimension_numbers = #tpu.dot_dimension_numbers<[1], [0], [0], [1], [0, 0, 1, 1], [], []>} : vector<64x256xf32>, vector<256x256xf32>, vector<64x256xf32> -> vector<64x256xf32>
    %cst_6 = arith.constant dense<0.000000e+00> : vector<64x256xf32>
    %5 = tpu.matmul %1, %3, %cst_6 {dimension_numbers = #tpu.dot_dimension_numbers<[1], [0], [0], [1], [0, 0, 1, 1], [], []>} : vector<64x256xf32>, vector<256x256xf32>, vector<64x256xf32> -> vector<64x256xf32>
    %6 = vector.extract_strided_slice %1 {offsets = [0, 0], sizes = [8, 256], strides = [1, 1]} : vector<64x256xf32> to vector<8x256xf32>
    %c0_7 = arith.constant 0 : index
    %7 = memref.load %arg1[%c0_7] : memref<32xf32, #tpu.memory_space<smem>>
    %8 = vector.broadcast %7 : f32 to vector<8x256xf32>
    %9 = arith.mulf %6, %8 : vector<8x256xf32>
    %10 = vector.extract_strided_slice %1 {offsets = [8, 0], sizes = [8, 256], strides = [1, 1]} : vector<64x256xf32> to vector<8x256xf32>
    %c1 = arith.constant 1 : index
    %11 = memref.load %arg1[%c1] : memref<32xf32, #tpu.memory_space<smem>>
    %12 = vector.broadcast %11 : f32 to vector<8x256xf32>
    %13 = arith.mulf %10, %12 : vector<8x256xf32>
    %14 = arith.addf %9, %13 : vector<8x256xf32>
    %15 = vector.extract_strided_slice %1 {offsets = [16, 0], sizes = [8, 256], strides = [1, 1]} : vector<64x256xf32> to vector<8x256xf32>
    %c2 = arith.constant 2 : index
    %16 = memref.load %arg1[%c2] : memref<32xf32, #tpu.memory_space<smem>>
    %17 = vector.broadcast %16 : f32 to vector<8x256xf32>
    %18 = arith.mulf %15, %17 : vector<8x256xf32>
    %19 = arith.addf %14, %18 : vector<8x256xf32>
    %20 = vector.extract_strided_slice %1 {offsets = [24, 0], sizes = [8, 256], strides = [1, 1]} : vector<64x256xf32> to vector<8x256xf32>
    %c3 = arith.constant 3 : index
    %21 = memref.load %arg1[%c3] : memref<32xf32, #tpu.memory_space<smem>>
    %22 = vector.broadcast %21 : f32 to vector<8x256xf32>
    %23 = arith.mulf %20, %22 : vector<8x256xf32>
    %24 = arith.addf %19, %23 : vector<8x256xf32>
    %c0_8 = arith.constant 0 : index
    %25 = memref.load %arg2[%c0_8] : memref<8xf32, #tpu.memory_space<smem>>
    %26 = vector.broadcast %25 : f32 to vector<8x256xf32>
    %27 = arith.addf %24, %26 : vector<8x256xf32>
    %cst_9 = arith.constant 0.000000e+00 : f32
    %28 = vector.broadcast %cst_9 : f32 to vector<8x256xf32>
    %29 = arith.maximumf %27, %28 : vector<8x256xf32>
    %30 = vector.extract_strided_slice %4 {offsets = [0, 0], sizes = [8, 256], strides = [1, 1]} : vector<64x256xf32> to vector<8x256xf32>
    %31 = arith.mulf %30, %29 : vector<8x256xf32>
    %32 = vector.extract_strided_slice %5 {offsets = [0, 0], sizes = [8, 256], strides = [1, 1]} : vector<64x256xf32> to vector<8x256xf32>
    %33 = arith.mulf %32, %29 : vector<8x256xf32>
    %34 = vector.extract_strided_slice %1 {offsets = [32, 0], sizes = [8, 256], strides = [1, 1]} : vector<64x256xf32> to vector<8x256xf32>
    %c16 = arith.constant 16 : index
    %35 = memref.load %arg1[%c16] : memref<32xf32, #tpu.memory_space<smem>>
    %36 = vector.broadcast %35 : f32 to vector<8x256xf32>
    %37 = arith.mulf %34, %36 : vector<8x256xf32>
    %38 = vector.extract_strided_slice %1 {offsets = [40, 0], sizes = [8, 256], strides = [1, 1]} : vector<64x256xf32> to vector<8x256xf32>
    %c17 = arith.constant 17 : index
    %39 = memref.load %arg1[%c17] : memref<32xf32, #tpu.memory_space<smem>>
    %40 = vector.broadcast %39 : f32 to vector<8x256xf32>
    %41 = arith.mulf %38, %40 : vector<8x256xf32>
    %42 = arith.addf %37, %41 : vector<8x256xf32>
    %43 = vector.extract_strided_slice %1 {offsets = [48, 0], sizes = [8, 256], strides = [1, 1]} : vector<64x256xf32> to vector<8x256xf32>
    %c18 = arith.constant 18 : index
    %44 = memref.load %arg1[%c18] : memref<32xf32, #tpu.memory_space<smem>>
    %45 = vector.broadcast %44 : f32 to vector<8x256xf32>
    %46 = arith.mulf %43, %45 : vector<8x256xf32>
    %47 = arith.addf %42, %46 : vector<8x256xf32>
    %48 = vector.extract_strided_slice %1 {offsets = [56, 0], sizes = [8, 256], strides = [1, 1]} : vector<64x256xf32> to vector<8x256xf32>
    %c19 = arith.constant 19 : index
    %49 = memref.load %arg1[%c19] : memref<32xf32, #tpu.memory_space<smem>>
    %50 = vector.broadcast %49 : f32 to vector<8x256xf32>
    %51 = arith.mulf %48, %50 : vector<8x256xf32>
    %52 = arith.addf %47, %51 : vector<8x256xf32>
    %c4 = arith.constant 4 : index
    %53 = memref.load %arg2[%c4] : memref<8xf32, #tpu.memory_space<smem>>
    %54 = vector.broadcast %53 : f32 to vector<8x256xf32>
    %55 = arith.addf %52, %54 : vector<8x256xf32>
    %cst_10 = arith.constant 0.000000e+00 : f32
    %56 = vector.broadcast %cst_10 : f32 to vector<8x256xf32>
    %57 = arith.maximumf %55, %56 : vector<8x256xf32>
    %58 = vector.extract_strided_slice %4 {offsets = [32, 0], sizes = [8, 256], strides = [1, 1]} : vector<64x256xf32> to vector<8x256xf32>
    %59 = arith.mulf %58, %57 : vector<8x256xf32>
    %60 = vector.extract_strided_slice %5 {offsets = [32, 0], sizes = [8, 256], strides = [1, 1]} : vector<64x256xf32> to vector<8x256xf32>
    %61 = arith.mulf %60, %57 : vector<8x256xf32>
    %62 = arith.addf %31, %59 : vector<8x256xf32>
    %63 = arith.addf %33, %61 : vector<8x256xf32>
    %64 = vector.extract_strided_slice %1 {offsets = [0, 0], sizes = [8, 256], strides = [1, 1]} : vector<64x256xf32> to vector<8x256xf32>
    %c4_11 = arith.constant 4 : index
    %65 = memref.load %arg1[%c4_11] : memref<32xf32, #tpu.memory_space<smem>>
    %66 = vector.broadcast %65 : f32 to vector<8x256xf32>
    %67 = arith.mulf %64, %66 : vector<8x256xf32>
    %68 = vector.extract_strided_slice %1 {offsets = [8, 0], sizes = [8, 256], strides = [1, 1]} : vector<64x256xf32> to vector<8x256xf32>
    %c5 = arith.constant 5 : index
    %69 = memref.load %arg1[%c5] : memref<32xf32, #tpu.memory_space<smem>>
    %70 = vector.broadcast %69 : f32 to vector<8x256xf32>
    %71 = arith.mulf %68, %70 : vector<8x256xf32>
    %72 = arith.addf %67, %71 : vector<8x256xf32>
    %73 = vector.extract_strided_slice %1 {offsets = [16, 0], sizes = [8, 256], strides = [1, 1]} : vector<64x256xf32> to vector<8x256xf32>
    %c6 = arith.constant 6 : index
    %74 = memref.load %arg1[%c6] : memref<32xf32, #tpu.memory_space<smem>>
    %75 = vector.broadcast %74 : f32 to vector<8x256xf32>
    %76 = arith.mulf %73, %75 : vector<8x256xf32>
    %77 = arith.addf %72, %76 : vector<8x256xf32>
    %78 = vector.extract_strided_slice %1 {offsets = [24, 0], sizes = [8, 256], strides = [1, 1]} : vector<64x256xf32> to vector<8x256xf32>
    %c7 = arith.constant 7 : index
    %79 = memref.load %arg1[%c7] : memref<32xf32, #tpu.memory_space<smem>>
    %80 = vector.broadcast %79 : f32 to vector<8x256xf32>
    %81 = arith.mulf %78, %80 : vector<8x256xf32>
    %82 = arith.addf %77, %81 : vector<8x256xf32>
    %c1_12 = arith.constant 1 : index
    %83 = memref.load %arg2[%c1_12] : memref<8xf32, #tpu.memory_space<smem>>
    %84 = vector.broadcast %83 : f32 to vector<8x256xf32>
    %85 = arith.addf %82, %84 : vector<8x256xf32>
    %cst_13 = arith.constant 0.000000e+00 : f32
    %86 = vector.broadcast %cst_13 : f32 to vector<8x256xf32>
    %87 = arith.maximumf %85, %86 : vector<8x256xf32>
    %88 = vector.extract_strided_slice %4 {offsets = [8, 0], sizes = [8, 256], strides = [1, 1]} : vector<64x256xf32> to vector<8x256xf32>
    %89 = arith.mulf %88, %87 : vector<8x256xf32>
    %90 = vector.extract_strided_slice %5 {offsets = [8, 0], sizes = [8, 256], strides = [1, 1]} : vector<64x256xf32> to vector<8x256xf32>
    %91 = arith.mulf %90, %87 : vector<8x256xf32>
    %92 = vector.extract_strided_slice %1 {offsets = [32, 0], sizes = [8, 256], strides = [1, 1]} : vector<64x256xf32> to vector<8x256xf32>
    %c20 = arith.constant 20 : index
    %93 = memref.load %arg1[%c20] : memref<32xf32, #tpu.memory_space<smem>>
    %94 = vector.broadcast %93 : f32 to vector<8x256xf32>
    %95 = arith.mulf %92, %94 : vector<8x256xf32>
    %96 = vector.extract_strided_slice %1 {offsets = [40, 0], sizes = [8, 256], strides = [1, 1]} : vector<64x256xf32> to vector<8x256xf32>
    %c21 = arith.constant 21 : index
    %97 = memref.load %arg1[%c21] : memref<32xf32, #tpu.memory_space<smem>>
    %98 = vector.broadcast %97 : f32 to vector<8x256xf32>
    %99 = arith.mulf %96, %98 : vector<8x256xf32>
    %100 = arith.addf %95, %99 : vector<8x256xf32>
    %101 = vector.extract_strided_slice %1 {offsets = [48, 0], sizes = [8, 256], strides = [1, 1]} : vector<64x256xf32> to vector<8x256xf32>
    %c22 = arith.constant 22 : index
    %102 = memref.load %arg1[%c22] : memref<32xf32, #tpu.memory_space<smem>>
    %103 = vector.broadcast %102 : f32 to vector<8x256xf32>
    %104 = arith.mulf %101, %103 : vector<8x256xf32>
    %105 = arith.addf %100, %104 : vector<8x256xf32>
    %106 = vector.extract_strided_slice %1 {offsets = [56, 0], sizes = [8, 256], strides = [1, 1]} : vector<64x256xf32> to vector<8x256xf32>
    %c23 = arith.constant 23 : index
    %107 = memref.load %arg1[%c23] : memref<32xf32, #tpu.memory_space<smem>>
    %108 = vector.broadcast %107 : f32 to vector<8x256xf32>
    %109 = arith.mulf %106, %108 : vector<8x256xf32>
    %110 = arith.addf %105, %109 : vector<8x256xf32>
    %c5_14 = arith.constant 5 : index
    %111 = memref.load %arg2[%c5_14] : memref<8xf32, #tpu.memory_space<smem>>
    %112 = vector.broadcast %111 : f32 to vector<8x256xf32>
    %113 = arith.addf %110, %112 : vector<8x256xf32>
    %cst_15 = arith.constant 0.000000e+00 : f32
    %114 = vector.broadcast %cst_15 : f32 to vector<8x256xf32>
    %115 = arith.maximumf %113, %114 : vector<8x256xf32>
    %116 = vector.extract_strided_slice %4 {offsets = [40, 0], sizes = [8, 256], strides = [1, 1]} : vector<64x256xf32> to vector<8x256xf32>
    %117 = arith.mulf %116, %115 : vector<8x256xf32>
    %118 = vector.extract_strided_slice %5 {offsets = [40, 0], sizes = [8, 256], strides = [1, 1]} : vector<64x256xf32> to vector<8x256xf32>
    %119 = arith.mulf %118, %115 : vector<8x256xf32>
    %120 = arith.addf %89, %117 : vector<8x256xf32>
    %121 = arith.addf %91, %119 : vector<8x256xf32>
    %122 = vector.extract_strided_slice %1 {offsets = [0, 0], sizes = [8, 256], strides = [1, 1]} : vector<64x256xf32> to vector<8x256xf32>
    %c8 = arith.constant 8 : index
    %123 = memref.load %arg1[%c8] : memref<32xf32, #tpu.memory_space<smem>>
    %124 = vector.broadcast %123 : f32 to vector<8x256xf32>
    %125 = arith.mulf %122, %124 : vector<8x256xf32>
    %126 = vector.extract_strided_slice %1 {offsets = [8, 0], sizes = [8, 256], strides = [1, 1]} : vector<64x256xf32> to vector<8x256xf32>
    %c9 = arith.constant 9 : index
    %127 = memref.load %arg1[%c9] : memref<32xf32, #tpu.memory_space<smem>>
    %128 = vector.broadcast %127 : f32 to vector<8x256xf32>
    %129 = arith.mulf %126, %128 : vector<8x256xf32>
    %130 = arith.addf %125, %129 : vector<8x256xf32>
    %131 = vector.extract_strided_slice %1 {offsets = [16, 0], sizes = [8, 256], strides = [1, 1]} : vector<64x256xf32> to vector<8x256xf32>
    %c10 = arith.constant 10 : index
    %132 = memref.load %arg1[%c10] : memref<32xf32, #tpu.memory_space<smem>>
    %133 = vector.broadcast %132 : f32 to vector<8x256xf32>
    %134 = arith.mulf %131, %133 : vector<8x256xf32>
    %135 = arith.addf %130, %134 : vector<8x256xf32>
    %136 = vector.extract_strided_slice %1 {offsets = [24, 0], sizes = [8, 256], strides = [1, 1]} : vector<64x256xf32> to vector<8x256xf32>
    %c11 = arith.constant 11 : index
    %137 = memref.load %arg1[%c11] : memref<32xf32, #tpu.memory_space<smem>>
    %138 = vector.broadcast %137 : f32 to vector<8x256xf32>
    %139 = arith.mulf %136, %138 : vector<8x256xf32>
    %140 = arith.addf %135, %139 : vector<8x256xf32>
    %c2_16 = arith.constant 2 : index
    %141 = memref.load %arg2[%c2_16] : memref<8xf32, #tpu.memory_space<smem>>
    %142 = vector.broadcast %141 : f32 to vector<8x256xf32>
    %143 = arith.addf %140, %142 : vector<8x256xf32>
    %cst_17 = arith.constant 0.000000e+00 : f32
    %144 = vector.broadcast %cst_17 : f32 to vector<8x256xf32>
    %145 = arith.maximumf %143, %144 : vector<8x256xf32>
    %146 = vector.extract_strided_slice %4 {offsets = [16, 0], sizes = [8, 256], strides = [1, 1]} : vector<64x256xf32> to vector<8x256xf32>
    %147 = arith.mulf %146, %145 : vector<8x256xf32>
    %148 = vector.extract_strided_slice %5 {offsets = [16, 0], sizes = [8, 256], strides = [1, 1]} : vector<64x256xf32> to vector<8x256xf32>
    %149 = arith.mulf %148, %145 : vector<8x256xf32>
    %150 = vector.extract_strided_slice %1 {offsets = [32, 0], sizes = [8, 256], strides = [1, 1]} : vector<64x256xf32> to vector<8x256xf32>
    %c24 = arith.constant 24 : index
    %151 = memref.load %arg1[%c24] : memref<32xf32, #tpu.memory_space<smem>>
    %152 = vector.broadcast %151 : f32 to vector<8x256xf32>
    %153 = arith.mulf %150, %152 : vector<8x256xf32>
    %154 = vector.extract_strided_slice %1 {offsets = [40, 0], sizes = [8, 256], strides = [1, 1]} : vector<64x256xf32> to vector<8x256xf32>
    %c25 = arith.constant 25 : index
    %155 = memref.load %arg1[%c25] : memref<32xf32, #tpu.memory_space<smem>>
    %156 = vector.broadcast %155 : f32 to vector<8x256xf32>
    %157 = arith.mulf %154, %156 : vector<8x256xf32>
    %158 = arith.addf %153, %157 : vector<8x256xf32>
    %159 = vector.extract_strided_slice %1 {offsets = [48, 0], sizes = [8, 256], strides = [1, 1]} : vector<64x256xf32> to vector<8x256xf32>
    %c26 = arith.constant 26 : index
    %160 = memref.load %arg1[%c26] : memref<32xf32, #tpu.memory_space<smem>>
    %161 = vector.broadcast %160 : f32 to vector<8x256xf32>
    %162 = arith.mulf %159, %161 : vector<8x256xf32>
    %163 = arith.addf %158, %162 : vector<8x256xf32>
    %164 = vector.extract_strided_slice %1 {offsets = [56, 0], sizes = [8, 256], strides = [1, 1]} : vector<64x256xf32> to vector<8x256xf32>
    %c27 = arith.constant 27 : index
    %165 = memref.load %arg1[%c27] : memref<32xf32, #tpu.memory_space<smem>>
    %166 = vector.broadcast %165 : f32 to vector<8x256xf32>
    %167 = arith.mulf %164, %166 : vector<8x256xf32>
    %168 = arith.addf %163, %167 : vector<8x256xf32>
    %c6_18 = arith.constant 6 : index
    %169 = memref.load %arg2[%c6_18] : memref<8xf32, #tpu.memory_space<smem>>
    %170 = vector.broadcast %169 : f32 to vector<8x256xf32>
    %171 = arith.addf %168, %170 : vector<8x256xf32>
    %cst_19 = arith.constant 0.000000e+00 : f32
    %172 = vector.broadcast %cst_19 : f32 to vector<8x256xf32>
    %173 = arith.maximumf %171, %172 : vector<8x256xf32>
    %174 = vector.extract_strided_slice %4 {offsets = [48, 0], sizes = [8, 256], strides = [1, 1]} : vector<64x256xf32> to vector<8x256xf32>
    %175 = arith.mulf %174, %173 : vector<8x256xf32>
    %176 = vector.extract_strided_slice %5 {offsets = [48, 0], sizes = [8, 256], strides = [1, 1]} : vector<64x256xf32> to vector<8x256xf32>
    %177 = arith.mulf %176, %173 : vector<8x256xf32>
    %178 = arith.addf %147, %175 : vector<8x256xf32>
    %179 = arith.addf %149, %177 : vector<8x256xf32>
    %180 = vector.extract_strided_slice %1 {offsets = [0, 0], sizes = [8, 256], strides = [1, 1]} : vector<64x256xf32> to vector<8x256xf32>
    %c12 = arith.constant 12 : index
    %181 = memref.load %arg1[%c12] : memref<32xf32, #tpu.memory_space<smem>>
    %182 = vector.broadcast %181 : f32 to vector<8x256xf32>
    %183 = arith.mulf %180, %182 : vector<8x256xf32>
    %184 = vector.extract_strided_slice %1 {offsets = [8, 0], sizes = [8, 256], strides = [1, 1]} : vector<64x256xf32> to vector<8x256xf32>
    %c13 = arith.constant 13 : index
    %185 = memref.load %arg1[%c13] : memref<32xf32, #tpu.memory_space<smem>>
    %186 = vector.broadcast %185 : f32 to vector<8x256xf32>
    %187 = arith.mulf %184, %186 : vector<8x256xf32>
    %188 = arith.addf %183, %187 : vector<8x256xf32>
    %189 = vector.extract_strided_slice %1 {offsets = [16, 0], sizes = [8, 256], strides = [1, 1]} : vector<64x256xf32> to vector<8x256xf32>
    %c14 = arith.constant 14 : index
    %190 = memref.load %arg1[%c14] : memref<32xf32, #tpu.memory_space<smem>>
    %191 = vector.broadcast %190 : f32 to vector<8x256xf32>
    %192 = arith.mulf %189, %191 : vector<8x256xf32>
    %193 = arith.addf %188, %192 : vector<8x256xf32>
    %194 = vector.extract_strided_slice %1 {offsets = [24, 0], sizes = [8, 256], strides = [1, 1]} : vector<64x256xf32> to vector<8x256xf32>
    %c15 = arith.constant 15 : index
    %195 = memref.load %arg1[%c15] : memref<32xf32, #tpu.memory_space<smem>>
    %196 = vector.broadcast %195 : f32 to vector<8x256xf32>
    %197 = arith.mulf %194, %196 : vector<8x256xf32>
    %198 = arith.addf %193, %197 : vector<8x256xf32>
    %c3_20 = arith.constant 3 : index
    %199 = memref.load %arg2[%c3_20] : memref<8xf32, #tpu.memory_space<smem>>
    %200 = vector.broadcast %199 : f32 to vector<8x256xf32>
    %201 = arith.addf %198, %200 : vector<8x256xf32>
    %cst_21 = arith.constant 0.000000e+00 : f32
    %202 = vector.broadcast %cst_21 : f32 to vector<8x256xf32>
    %203 = arith.maximumf %201, %202 : vector<8x256xf32>
    %204 = vector.extract_strided_slice %4 {offsets = [24, 0], sizes = [8, 256], strides = [1, 1]} : vector<64x256xf32> to vector<8x256xf32>
    %205 = arith.mulf %204, %203 : vector<8x256xf32>
    %206 = vector.extract_strided_slice %5 {offsets = [24, 0], sizes = [8, 256], strides = [1, 1]} : vector<64x256xf32> to vector<8x256xf32>
    %207 = arith.mulf %206, %203 : vector<8x256xf32>
    %208 = vector.extract_strided_slice %1 {offsets = [32, 0], sizes = [8, 256], strides = [1, 1]} : vector<64x256xf32> to vector<8x256xf32>
    %c28 = arith.constant 28 : index
    %209 = memref.load %arg1[%c28] : memref<32xf32, #tpu.memory_space<smem>>
    %210 = vector.broadcast %209 : f32 to vector<8x256xf32>
    %211 = arith.mulf %208, %210 : vector<8x256xf32>
    %212 = vector.extract_strided_slice %1 {offsets = [40, 0], sizes = [8, 256], strides = [1, 1]} : vector<64x256xf32> to vector<8x256xf32>
    %c29 = arith.constant 29 : index
    %213 = memref.load %arg1[%c29] : memref<32xf32, #tpu.memory_space<smem>>
    %214 = vector.broadcast %213 : f32 to vector<8x256xf32>
    %215 = arith.mulf %212, %214 : vector<8x256xf32>
    %216 = arith.addf %211, %215 : vector<8x256xf32>
    %217 = vector.extract_strided_slice %1 {offsets = [48, 0], sizes = [8, 256], strides = [1, 1]} : vector<64x256xf32> to vector<8x256xf32>
    %c30 = arith.constant 30 : index
    %218 = memref.load %arg1[%c30] : memref<32xf32, #tpu.memory_space<smem>>
    %219 = vector.broadcast %218 : f32 to vector<8x256xf32>
    %220 = arith.mulf %217, %219 : vector<8x256xf32>
    %221 = arith.addf %216, %220 : vector<8x256xf32>
    %222 = vector.extract_strided_slice %1 {offsets = [56, 0], sizes = [8, 256], strides = [1, 1]} : vector<64x256xf32> to vector<8x256xf32>
    %c31 = arith.constant 31 : index
    %223 = memref.load %arg1[%c31] : memref<32xf32, #tpu.memory_space<smem>>
    %224 = vector.broadcast %223 : f32 to vector<8x256xf32>
    %225 = arith.mulf %222, %224 : vector<8x256xf32>
    %226 = arith.addf %221, %225 : vector<8x256xf32>
    %c7_22 = arith.constant 7 : index
    %227 = memref.load %arg2[%c7_22] : memref<8xf32, #tpu.memory_space<smem>>
    %228 = vector.broadcast %227 : f32 to vector<8x256xf32>
    %229 = arith.addf %226, %228 : vector<8x256xf32>
    %cst_23 = arith.constant 0.000000e+00 : f32
    %230 = vector.broadcast %cst_23 : f32 to vector<8x256xf32>
    %231 = arith.maximumf %229, %230 : vector<8x256xf32>
    %232 = vector.extract_strided_slice %4 {offsets = [56, 0], sizes = [8, 256], strides = [1, 1]} : vector<64x256xf32> to vector<8x256xf32>
    %233 = arith.mulf %232, %231 : vector<8x256xf32>
    %234 = vector.extract_strided_slice %5 {offsets = [56, 0], sizes = [8, 256], strides = [1, 1]} : vector<64x256xf32> to vector<8x256xf32>
    %235 = arith.mulf %234, %231 : vector<8x256xf32>
    %236 = arith.addf %205, %233 : vector<8x256xf32>
    %237 = arith.addf %207, %235 : vector<8x256xf32>
    %238 = tpu.concatenate %62, %120, %178, %236 in 0 : vector<8x256xf32>, vector<8x256xf32>, vector<8x256xf32>, vector<8x256xf32> -> vector<32x256xf32>
    %239 = tpu.concatenate %63, %121, %179, %237 in 0 : vector<8x256xf32>, vector<8x256xf32>, vector<8x256xf32>, vector<8x256xf32> -> vector<32x256xf32>
    %cst_24 = arith.constant dense<0.000000e+00> : vector<32x256xf32>
    %240 = tpu.matmul %238, %2, %cst_24 {dimension_numbers = #tpu.dot_dimension_numbers<[1], [0], [0], [1], [0, 0, 1, 1], [], []>} : vector<32x256xf32>, vector<256x256xf32>, vector<32x256xf32> -> vector<32x256xf32>
    %cst_25 = arith.constant dense<0.000000e+00> : vector<32x256xf32>
    %241 = tpu.matmul %239, %3, %cst_25 {dimension_numbers = #tpu.dot_dimension_numbers<[1], [0], [0], [1], [0, 0, 1, 1], [], []>} : vector<32x256xf32>, vector<256x256xf32>, vector<32x256xf32> -> vector<32x256xf32>
    %242 = arith.addf %240, %241 : vector<32x256xf32>
    %c0_26 = arith.constant 0 : index
    %c0_27 = arith.constant 0 : index
    %c0_28 = arith.constant 0 : index
    %243 = vector.load %arg6[%c0_26, %c0_27, %c0_28] : memref<1x32x256xf32, #tpu.memory_space<vmem>>, vector<1x32x256xf32>
    %244 = vector.shape_cast %243 : vector<1x32x256xf32> to vector<32x256xf32>
    %245 = vector.shape_cast %242 : vector<32x256xf32> to vector<1x32x256xf32>
    tpu.vector_store %arg6[%c0_26, %c0_27, %c0_28], %245 {strides = array<i32>} : memref<1x32x256xf32, #tpu.memory_space<vmem>>, vector<1x32x256xf32>,
    return
  }
  func.func @transform_0(%arg0: i32) -> i32 {
    %c0_i32 = arith.constant 0 : i32
    %c0_i32_0 = arith.constant 0 : i32
    return %c0_i32 : i32
  }
  func.func @transform_1(%arg0: i32) -> i32 {
    %c0_i32 = arith.constant 0 : i32
    %c0_i32_0 = arith.constant 0 : i32
    return %c0_i32 : i32
  }
  func.func @transform_2(%arg0: i32) -> (i32, i32, i32) {
    %c0_i32 = arith.constant 0 : i32
    %c0_i32_0 = arith.constant 0 : i32
    %c0_i32_1 = arith.constant 0 : i32
    return %arg0, %c0_i32, %c0_i32_0 : i32, i32, i32
  }
  func.func @transform_3(%arg0: i32) -> (i32, i32) {
    %c0_i32 = arith.constant 0 : i32
    %c0_i32_0 = arith.constant 0 : i32
    %c0_i32_1 = arith.constant 0 : i32
    return %c0_i32, %c0_i32_0 : i32, i32
  }
  func.func @transform_4(%arg0: i32) -> (i32, i32) {
    %c0_i32 = arith.constant 0 : i32
    %c0_i32_0 = arith.constant 0 : i32
    %c0_i32_1 = arith.constant 0 : i32
    return %c0_i32, %c0_i32_0 : i32, i32
  }
  func.func @transform_5(%arg0: i32) -> (i32, i32, i32) {
    %c0_i32 = arith.constant 0 : i32
    %c0_i32_0 = arith.constant 0 : i32
    %c0_i32_1 = arith.constant 0 : i32
    return %arg0, %c0_i32, %c0_i32_0 : i32, i32, i32
  }
}

</mosaic_0001>

<llo_original>
// kernel: tpu_custom_call.1
$region0: #{tpu_custom_call.1}
  #allocation0 [shape = 'u32[]', space=smem, size = 0x4, offset = 0x4, fixed_abs, tag = 'smem constant byte address 0x4 - core index']
  #allocation1 [shape = 'u32[144,128]{1,0:T(1,128)}', space=vmem, size = 0x12000, scoped, tag = 'internal scratch']
  %s0 = inlined_call_operand.hbm [shape: f32[32], index: 0, kind: input, shape index: {}]
  %s1 = inlined_call_operand.vmem [shape: f32[8], index: 1, kind: input, shape index: {}]
  %s2 = inlined_call_operand.hbm [shape: f32[1,64,256], index: 2, kind: input, shape index: {}]
  %s3 = inlined_call_operand.hbm [shape: f32[256,256], index: 3, kind: input, shape index: {}]
  %s4 = inlined_call_operand.hbm [shape: f32[256,256], index: 4, kind: input, shape index: {}]
  %s5 = inlined_call_operand.hbm [shape: f32[1,32,256], index: 5, kind: output, shape index: {}]
  %s6 = sld [smem:[#allocation0]]
  $region50: #{tpu_custom_call.1} parent=0
    _
  %s8 = ssub.s32 1, %s6
  %s9 = scalar_select 0, %s8, %s6
  $region1: #{tpu_custom_call.1} parent=0
    #allocation2 [shape = 'u8[512]{0}', space=smem, size = 0x200, scoped, tag = 'input window, operand 0, single buffered']
    #allocation3 [shape = 's32[1]{0}', space=sflag, size = 0x4, scoped, tag = 'scoped memory for tpu_custom_call.1']
    #allocation4 [shape = 's32[1]{0}', space=sflag, size = 0x4, scoped, tag = 'scoped memory for tpu_custom_call.1']
    #allocation5 [shape = 's32[1]{0}', space=sflag, size = 0x4, scoped, tag = 'scoped memory for tpu_custom_call.1']
    #allocation6 [shape = 's32[1]{0}', space=sflag, size = 0x4, scoped, tag = 'scoped memory for tpu_custom_call.1']
    #allocation7 [shape = 'u8[512]{0}', space=smem, size = 0x200, scoped, tag = 'input window, operand 1, single buffered']
    #allocation8 [shape = 'u8[65536]{0}', space=vmem, size = 0x10000, scoped, tag = 'input window, operand 2, single buffered']
    #allocation9 [shape = 'u8[262144]{0}', space=vmem, size = 0x40000, scoped, tag = 'input window, operand 3, single buffered']
    #allocation10 [shape = 's32[1]{0}', space=sflag, size = 0x4, scoped, tag = 'scoped memory for tpu_custom_call.1']
    #allocation11 [shape = 'u8[262144]{0}', space=vmem, size = 0x40000, scoped, tag = 'input window, operand 4, single buffered']
    #allocation12 [shape = 'u8[32768]{0}', space=vmem, size = 0x8000, scoped, tag = 'output window, operand 0, single buffered']
    %10 = vsyncpa [#allocation5], 0
    %11 = vsyncpa [#allocation6], 0
    %12 = vsyncpa [#allocation3], 0
    %13 = vsyncpa [#allocation10], 0
    %14 = vsyncpa [#allocation4], 0
    // Predicated region
    $region2: #{tpu_custom_call.1} parent=1 // pred_check
      _
    $region3: #{tpu_custom_call.1} parent=1 // pred_check_branch
      %16 = sbr.rel (0) target = $region5
    $region4: #{tpu_custom_call.1} parent=1 // pred_region
      %s18 = ssub.s32 16, 16
      %19 = vsyncadd [#allocation5], %s18
      %22 = dma.hbm_to_smem %s0, 16, [#allocation2], [#allocation5]
    $region5: #{tpu_custom_call.1} parent=1 // pred_fallthru
      _
    // Predicated region
    $region6: #{tpu_custom_call.1} parent=1 // pred_check
      _
    $region7: #{tpu_custom_call.1} parent=1 // pred_check_branch
      %24 = sbr.rel (0) target = $region9
    $region8: #{tpu_custom_call.1} parent=1 // pred_region
      %s26 = ssub.s32 16, 16
      %27 = vsyncadd [#allocation6], %s26
      %s29 = sshll.u32 %s1, 4
      %s30 = int_to_ptr.vmem [resolvable:$true] %s29
      %32 = dma.vmem_to_smem %s30, 16, [#allocation7], [#allocation6]
    $region9: #{tpu_custom_call.1} parent=1 // pred_fallthru
      _
    // Predicated region
    $region10: #{tpu_custom_call.1} parent=1 // pred_check
      _
    $region11: #{tpu_custom_call.1} parent=1 // pred_check_branch
      %34 = sbr.rel (0) target = $region13
    $region12: #{tpu_custom_call.1} parent=1 // pred_region
      %s36 = ssub.s32 2048, 2048
      %37 = vsyncadd [#allocation3], %s36
      %s38 = sshll.u32 [#allocation8], 4
      %s39 = int_to_ptr.vmem [resolvable:$true] %s38
      %44 = dma.hbm_to_vmem [thread:$0]  %s2, 2048, %s39, [#allocation3], 256, 256, 16
    $region13: #{tpu_custom_call.1} parent=1 // pred_fallthru
      _
    // Predicated region
    $region14: #{tpu_custom_call.1} parent=1 // pred_check
      _
    $region15: #{tpu_custom_call.1} parent=1 // pred_check_branch
      %46 = sbr.rel (0) target = $region17
    $region16: #{tpu_custom_call.1} parent=1 // pred_region
      %s48 = ssub.s32 8192, 8192
      %49 = vsyncadd [#allocation10], %s48
      %s50 = sshll.u32 [#allocation9], 4
      %s51 = int_to_ptr.vmem [resolvable:$true] %s50
      %56 = dma.hbm_to_vmem [thread:$0]  %s3, 8192, %s51, [#allocation10], 256, 256, 16
    $region17: #{tpu_custom_call.1} parent=1 // pred_fallthru
      _
    // Predicated region
    $region18: #{tpu_custom_call.1} parent=1 // pred_check
      _
    $region19: #{tpu_custom_call.1} parent=1 // pred_check_branch
      %58 = sbr.rel (0) target = $region21
    $region20: #{tpu_custom_call.1} parent=1 // pred_region
      %s60 = ssub.s32 8192, 8192
      %61 = vsyncadd [#allocation10], %s60
      %s62 = sshll.u32 [#allocation11], 4
      %s63 = int_to_ptr.vmem [resolvable:$true] %s62
      %68 = dma.hbm_to_vmem [thread:$0]  %s4, 8192, %s63, [#allocation10], 256, 256, 16
    $region21: #{tpu_custom_call.1} parent=1 // pred_fallthru
      _
    // Predicated region
    $region22: #{tpu_custom_call.1} parent=1 // pred_check
      _
    $region23: #{tpu_custom_call.1} parent=1 // pred_check_branch
      %70 = sbr.rel (0) target = $region25
    $region24: #{tpu_custom_call.1} parent=1 // pred_region
      %71 = dma.done [#allocation5], 16
    $region25: #{tpu_custom_call.1} parent=1 // pred_fallthru
      _
    // Predicated region
    $region26: #{tpu_custom_call.1} parent=1 // pred_check
      _
    $region27: #{tpu_custom_call.1} parent=1 // pred_check_branch
      %73 = sbr.rel (0) target = $region29
    $region28: #{tpu_custom_call.1} parent=1 // pred_region
      %74 = dma.done [#allocation6], 16
    $region29: #{tpu_custom_call.1} parent=1 // pred_fallthru
      _
    // Predicated region
    $region30: #{tpu_custom_call.1} parent=1 // pred_check
      _
    $region31: #{tpu_custom_call.1} parent=1 // pred_check_branch
      %76 = sbr.rel (0) target = $region33
    $region32: #{tpu_custom_call.1} parent=1 // pred_region
      %77 = dma.done [#allocation3], 2048
    $region33: #{tpu_custom_call.1} parent=1 // pred_fallthru
      _
    // Predicated region
    $region34: #{tpu_custom_call.1} parent=1 // pred_check
      _
    $region35: #{tpu_custom_call.1} parent=1 // pred_check_branch
      %79 = sbr.rel (0) target = $region37
    $region36: #{tpu_custom_call.1} parent=1 // pred_region
      %80 = dma.done [#allocation10], 8192
    $region37: #{tpu_custom_call.1} parent=1 // pred_fallthru
      _
    // Predicated region
    $region38: #{tpu_custom_call.1} parent=1 // pred_check
      _
    $region39: #{tpu_custom_call.1} parent=1 // pred_check_branch
      %82 = sbr.rel (0) target = $region41
    $region40: #{tpu_custom_call.1} parent=1 // pred_region
      %83 = dma.done [#allocation10], 8192
    $region41: #{tpu_custom_call.1} parent=1 // pred_fallthru
      _
    %84 = sfence
    %v85 = vld [vmem:[#allocation8] sm:$0xff]
    %v86 = vld [vmem:[#allocation8 + $0x8] sm:$0xff]
    %v87 = vld [vmem:[#allocation8 + $0x10] sm:$0xff]
    %v88 = vld [vmem:[#allocation8 + $0x18] sm:$0xff]
    %v89 = vld [vmem:[#allocation8 + $0x20] sm:$0xff]
    %v90 = vld [vmem:[#allocation8 + $0x28] sm:$0xff]
    %v91 = vld [vmem:[#allocation8 + $0x30] sm:$0xff]
    %v92 = vld [vmem:[#allocation8 + $0x38] sm:$0xff]
    %v93 = vld [vmem:[#allocation8 + $0x40] sm:$0xff]
    %v94 = vld [vmem:[#allocation8 + $0x48] sm:$0xff]
    %v95 = vld [vmem:[#allocation8 + $0x50] sm:$0xff]
    %v96 = vld [vmem:[#allocation8 + $0x58] sm:$0xff]
    %v97 = vld [vmem:[#allocation8 + $0x60] sm:$0xff]
    %v98 = vld [vmem:[#allocation8 + $0x68] sm:$0xff]
    %v99 = vld [vmem:[#allocation8 + $0x70] sm:$0xff]
    %v100 = vld [vmem:[#allocation8 + $0x78] sm:$0xff]
    %v101 = vld [vmem:[#allocation9] sm:$0xff]
    %v102 = vld [vmem:[#allocation9 + $0x8] sm:$0xff]
    %v103 = vld [vmem:[#allocation9 + $0x10] sm:$0xff]
    %v104 = vld [vmem:[#allocation9 + $0x18] sm:$0xff]
    %v105 = vld [vmem:[#allocation9 + $0x20] sm:$0xff]
    %v106 = vld [vmem:[#allocation9 + $0x28] sm:$0xff]
    %v107 = vld [vmem:[#allocation9 + $0x30] sm:$0xff]
    %v108 = vld [vmem:[#allocation9 + $0x38] sm:$0xff]
    %v109 = vld [vmem:[#allocation9 + $0x40] sm:$0xff]
    %v110 = vld [vmem:[#allocation9 + $0x48] sm:$0xff]
    %v111 = vld [vmem:[#allocation9 + $0x50] sm:$0xff]
    %v112 = vld [vmem:[#allocation9 + $0x58] sm:$0xff]
    %v113 = vld [vmem:[#allocation9 + $0x60] sm:$0xff]
    %v114 = vld [vmem:[#allocation9 + $0x68] sm:$0xff]
    %v115 = vld [vmem:[#allocation9 + $0x70] sm:$0xff]
    %v116 = vld [vmem:[#allocation9 + $0x78] sm:$0xff]
    %v117 = vld [vmem:[#allocation9 + $0x80] sm:$0xff]
    %v118 = vld [vmem:[#allocation9 + $0x88] sm:$0xff]
    %v119 = vld [vmem:[#allocation9 + $0x90] sm:$0xff]
    %v120 = vld [vmem:[#allocation9 + $0x98] sm:$0xff]
    %v121 = vld [vmem:[#allocation9 + $0xa0] sm:$0xff]
    %v122 = vld [vmem:[#allocation9 + $0xa8] sm:$0xff]
    %v123 = vld [vmem:[#allocation9 + $0xb0] sm:$0xff]
    %v124 = vld [vmem:[#allocation9 + $0xb8] sm:$0xff]
    %v125 = vld [vmem:[#allocation9 + $0xc0] sm:$0xff]
    %v126 = vld [vmem:[#allocation9 + $0xc8] sm:$0xff]
    %v127 = vld [vmem:[#allocation9 + $0xd0] sm:$0xff]
    %v128 = vld [vmem:[#allocation9 + $0xd8] sm:$0xff]
    %v129 = vld [vmem:[#allocation9 + $0xe0] sm:$0xff]
    %v130 = vld [vmem:[#allocation9 + $0xe8] sm:$0xff]
    %v131 = vld [vmem:[#allocation9 + $0xf0] sm:$0xff]
    %v132 = vld [vmem:[#allocation9 + $0xf8] sm:$0xff]
    %v133 = vld [vmem:[#allocation9 + $0x100] sm:$0xff]
    %v134 = vld [vmem:[#allocation9 + $0x108] sm:$0xff]
    %v135 = vld [vmem:[#allocation9 + $0x110] sm:$0xff]
    %v136 = vld [vmem:[#allocation9 + $0x118] sm:$0xff]
    %v137 = vld [vmem:[#allocation9 + $0x120] sm:$0xff]
    %v138 = vld [vmem:[#allocation9 + $0x128] sm:$0xff]
    %v139 = vld [vmem:[#allocation9 + $0x130] sm:$0xff]
    %v140 = vld [vmem:[#allocation9 + $0x138] sm:$0xff]
    %v141 = vld [vmem:[#allocation9 + $0x140] sm:$0xff]
    %v142 = vld [vmem:[#allocation9 + $0x148] sm:$0xff]
    %v143 = vld [vmem:[#allocation9 + $0x150] sm:$0xff]
    %v144 = vld [vmem:[#allocation9 + $0x158] sm:$0xff]
    %v145 = vld [vmem:[#allocation9 + $0x160] sm:$0xff]
    %v146 = vld [vmem:[#allocation9 + $0x168] sm:$0xff]
    %v147 = vld [vmem:[#allocation9 + $0x170] sm:$0xff]
    %v148 = vld [vmem:[#allocation9 + $0x178] sm:$0xff]
    %v149 = vld [vmem:[#allocation9 + $0x180] sm:$0xff]
    %v150 = vld [vmem:[#allocation9 + $0x188] sm:$0xff]
    %v151 = vld [vmem:[#allocation9 + $0x190] sm:$0xff]
    %v152 = vld [vmem:[#allocation9 + $0x198] sm:$0xff]
    %v153 = vld [vmem:[#allocation9 + $0x1a0] sm:$0xff]
    %v154 = vld [vmem:[#allocation9 + $0x1a8] sm:$0xff]
    %v155 = vld [vmem:[#allocation9 + $0x1b0] sm:$0xff]
    %v156 = vld [vmem:[#allocation9 + $0x1b8] sm:$0xff]
    %v157 = vld [vmem:[#allocation9 + $0x1c0] sm:$0xff]
    %v158 = vld [vmem:[#allocation9 + $0x1c8] sm:$0xff]
    %v159 = vld [vmem:[#allocation9 + $0x1d0] sm:$0xff]
    %v160 = vld [vmem:[#allocation9 + $0x1d8] sm:$0xff]
    %v161 = vld [vmem:[#allocation9 + $0x1e0] sm:$0xff]
    %v162 = vld [vmem:[#allocation9 + $0x1e8] sm:$0xff]
    %v163 = vld [vmem:[#allocation9 + $0x1f0] sm:$0xff]
    %v164 = vld [vmem:[#allocation9 + $0x1f8] sm:$0xff]
    %v165 = vld [vmem:[#allocation11] sm:$0xff]
    %v166 = vld [vmem:[#allocation11 + $0x8] sm:$0xff]
    %v167 = vld [vmem:[#allocation11 + $0x10] sm:$0xff]
    %v168 = vld [vmem:[#allocation11 + $0x18] sm:$0xff]
    %v169 = vld [vmem:[#allocation11 + $0x20] sm:$0xff]
    %v170 = vld [vmem:[#allocation11 + $0x28] sm:$0xff]
    %v171 = vld [vmem:[#allocation11 + $0x30] sm:$0xff]
    %v172 = vld [vmem:[#allocation11 + $0x38] sm:$0xff]
    %v173 = vld [vmem:[#allocation11 + $0x40] sm:$0xff]
    %v174 = vld [vmem:[#allocation11 + $0x48] sm:$0xff]
    %v175 = vld [vmem:[#allocation11 + $0x50] sm:$0xff]
    %v176 = vld [vmem:[#allocation11 + $0x58] sm:$0xff]
    %v177 = vld [vmem:[#allocation11 + $0x60] sm:$0xff]
    %v178 = vld [vmem:[#allocation11 + $0x68] sm:$0xff]
    %v179 = vld [vmem:[#allocation11 + $0x70] sm:$0xff]
    %v180 = vld [vmem:[#allocation11 + $0x78] sm:$0xff]
    %v181 = vld [vmem:[#allocation11 + $0x80] sm:$0xff]
    %v182 = vld [vmem:[#allocation11 + $0x88] sm:$0xff]
    %v183 = vld [vmem:[#allocation11 + $0x90] sm:$0xff]
    %v184 = vld [vmem:[#allocation11 + $0x98] sm:$0xff]
    %v185 = vld [vmem:[#allocation11 + $0xa0] sm:$0xff]
    %v186 = vld [vmem:[#allocation11 + $0xa8] sm:$0xff]
    %v187 = vld [vmem:[#allocation11 + $0xb0] sm:$0xff]
    %v188 = vld [vmem:[#allocation11 + $0xb8] sm:$0xff]
    %v189 = vld [vmem:[#allocation11 + $0xc0] sm:$0xff]
    %v190 = vld [vmem:[#allocation11 + $0xc8] sm:$0xff]
    %v191 = vld [vmem:[#allocation11 + $0xd0] sm:$0xff]
    %v192 = vld [vmem:[#allocation11 + $0xd8] sm:$0xff]
    %v193 = vld [vmem:[#allocation11 + $0xe0] sm:$0xff]
    %v194 = vld [vmem:[#allocation11 + $0xe8] sm:$0xff]
    %v195 = vld [vmem:[#allocation11 + $0xf0] sm:$0xff]
    %v196 = vld [vmem:[#allocation11 + $0xf8] sm:$0xff]
    %v197 = vld [vmem:[#allocation11 + $0x100] sm:$0xff]
    %v198 = vld [vmem:[#allocation11 + $0x108] sm:$0xff]
    %v199 = vld [vmem:[#allocation11 + $0x110] sm:$0xff]
    %v200 = vld [vmem:[#allocation11 + $0x118] sm:$0xff]
    %v201 = vld [vmem:[#allocation11 + $0x120] sm:$0xff]
    %v202 = vld [vmem:[#allocation11 + $0x128] sm:$0xff]
    %v203 = vld [vmem:[#allocation11 + $0x130] sm:$0xff]
    %v204 = vld [vmem:[#allocation11 + $0x138] sm:$0xff]
    %v205 = vld [vmem:[#allocation11 + $0x140] sm:$0xff]
    %v206 = vld [vmem:[#allocation11 + $0x148] sm:$0xff]
    %v207 = vld [vmem:[#allocation11 + $0x150] sm:$0xff]
    %v208 = vld [vmem:[#allocation11 + $0x158] sm:$0xff]
    %v209 = vld [vmem:[#allocation11 + $0x160] sm:$0xff]
    %v210 = vld [vmem:[#allocation11 + $0x168] sm:$0xff]
    %v211 = vld [vmem:[#allocation11 + $0x170] sm:$0xff]
    %v212 = vld [vmem:[#allocation11 + $0x178] sm:$0xff]
    %v213 = vld [vmem:[#allocation11 + $0x180] sm:$0xff]
    %v214 = vld [vmem:[#allocation11 + $0x188] sm:$0xff]
    %v215 = vld [vmem:[#allocation11 + $0x190] sm:$0xff]
    %v216 = vld [vmem:[#allocation11 + $0x198] sm:$0xff]
    %v217 = vld [vmem:[#allocation11 + $0x1a0] sm:$0xff]
    %v218 = vld [vmem:[#allocation11 + $0x1a8] sm:$0xff]
    %v219 = vld [vmem:[#allocation11 + $0x1b0] sm:$0xff]
    %v220 = vld [vmem:[#allocation11 + $0x1b8] sm:$0xff]
    %v221 = vld [vmem:[#allocation11 + $0x1c0] sm:$0xff]
    %v222 = vld [vmem:[#allocation11 + $0x1c8] sm:$0xff]
    %v223 = vld [vmem:[#allocation11 + $0x1d0] sm:$0xff]
    %v224 = vld [vmem:[#allocation11 + $0x1d8] sm:$0xff]
    %v225 = vld [vmem:[#allocation11 + $0x1e0] sm:$0xff]
    %v226 = vld [vmem:[#allocation11 + $0x1e8] sm:$0xff]
    %v227 = vld [vmem:[#allocation11 + $0x1f0] sm:$0xff]
    %v228 = vld [vmem:[#allocation11 + $0x1f8] sm:$0xff]
    %229 = vmatprep.subr.mxu0 %v132
    %230 = vmatpush1.msra.mxu0 %v131
    %231 = vmatprep.subr.mxu0 %v130
    %232 = vmatpush1.msra.mxu0 %v129
    %233 = vmatprep.subr.mxu0 %v128
    %234 = vmatpush1.msra.mxu0 %v127
    %235 = vmatprep.subr.mxu0 %v126
    %236 = vmatpush1.msra.mxu0 %v125
    %237 = vmatprep.subr.mxu0 %v124
    %238 = vmatpush1.msra.mxu0 %v123
    %239 = vmatprep.subr.mxu0 %v122
    %240 = vmatpush1.msra.mxu0 %v121
    %241 = vmatprep.subr.mxu0 %v120
    %242 = vmatpush1.msra.mxu0 %v119
    %243 = vmatprep.subr.mxu0 %v118
    %244 = vmatpush1.msra.mxu0 %v117
    %245 = vmatprep.subr.mxu0 %v116
    %246 = vmatpush1.msra.mxu0 %v115
    %247 = vmatprep.subr.mxu0 %v114
    %248 = vmatpush1.msra.mxu0 %v113
    %249 = vmatprep.subr.mxu0 %v112
    %250 = vmatpush1.msra.mxu0 %v111
    %251 = vmatprep.subr.mxu0 %v110
    %252 = vmatpush1.msra.mxu0 %v109
    %253 = vmatprep.subr.mxu0 %v108
    %254 = vmatpush1.msra.mxu0 %v107
    %255 = vmatprep.subr.mxu0 %v106
    %256 = vmatpush1.msra.mxu0 %v105
    %257 = vmatprep.subr.mxu0 %v104
    %258 = vmatpush1.msra.mxu0 %v103
    %259 = vmatprep.subr.mxu0 %v102
    %260 = vmatpush1.msra.mxu0 %v101
    %261 = vmatprep.subr.mxu0 %v164
    %262 = vmatpush2.msra.mxu0 %v163
    %263 = vmatprep.subr.mxu0 %v162
    %264 = vmatpush2.msra.mxu0 %v161
    %265 = vmatprep.subr.mxu0 %v160
    %266 = vmatpush2.msra.mxu0 %v159
    %267 = vmatprep.subr.mxu0 %v158
    %268 = vmatpush2.msra.mxu0 %v157
    %269 = vmatprep.subr.mxu0 %v156
    %270 = vmatpush2.msra.mxu0 %v155
    %271 = vmatprep.subr.mxu0 %v154
    %272 = vmatpush2.msra.mxu0 %v153
    %273 = vmatprep.subr.mxu0 %v152
    %274 = vmatpush2.msra.mxu0 %v151
    %275 = vmatprep.subr.mxu0 %v150
    %276 = vmatpush2.msra.mxu0 %v149
    %277 = vmatprep.subr.mxu0 %v148
    %278 = vmatpush2.msra.mxu0 %v147
    %279 = vmatprep.subr.mxu0 %v146
    %280 = vmatpush2.msra.mxu0 %v145
    %281 = vmatprep.subr.mxu0 %v144
    %282 = vmatpush2.msra.mxu0 %v143
    %283 = vmatprep.subr.mxu0 %v142
    %284 = vmatpush2.msra.mxu0 %v141
    %285 = vmatprep.subr.mxu0 %v140
    %286 = vmatpush2.msra.mxu0 %v139
    %287 = vmatprep.subr.mxu0 %v138
    %288 = vmatpush2.msra.mxu0 %v137
    %289 = vmatprep.subr.mxu0 %v136
    %290 = vmatpush2.msra.mxu0 %v135
    %291 = vmatprep.subr.mxu0 %v134
    %292 = vmatpush2.msra.mxu0 %v133
    %293 = vmatprep.mubr.f32.mxu0 %v86
    %294 = vmatmul.mubr.f32.gmra.mxu0 %v85
    %v295 = vpop.f32.mrf.mxu0
    %v296 = vadd.f32 0.0, %v295
    %v297 = vpop.f32.mrf.mxu0
    %v298 = vadd.f32 0.0, %v297
    %299 = vmatprep.mubr.f32.mxu0 %v88
    %300 = vmatmul.mubr.f32.gmra.mxu0 %v87
    %v301 = vpop.f32.mrf.mxu0
    %v302 = vadd.f32 0.0, %v301
    %v303 = vpop.f32.mrf.mxu0
    %v304 = vadd.f32 0.0, %v303
    %305 = vmatprep.mubr.f32.mxu0 %v90
    %306 = vmatmul.mubr.f32.gmra.mxu0 %v89
    %v307 = vpop.f32.mrf.mxu0
    %v308 = vadd.f32 0.0, %v307
    %v309 = vpop.f32.mrf.mxu0
    %v310 = vadd.f32 0.0, %v309
    %311 = vmatprep.mubr.f32.mxu0 %v92
    %312 = vmatmul.mubr.f32.gmra.mxu0 %v91
    %v313 = vpop.f32.mrf.mxu0
    %v314 = vadd.f32 0.0, %v313
    %v315 = vpop.f32.mrf.mxu0
    %v316 = vadd.f32 0.0, %v315
    %317 = vmatprep.mubr.f32.mxu0 %v94
    %318 = vmatmul.mubr.f32.gmra.mxu0 %v93
    %v319 = vpop.f32.mrf.mxu0
    %v320 = vadd.f32 0.0, %v319
    %v321 = vpop.f32.mrf.mxu0
    %v322 = vadd.f32 0.0, %v321
    %323 = vmatprep.mubr.f32.mxu0 %v96
    %324 = vmatmul.mubr.f32.gmra.mxu0 %v95
    %v325 = vpop.f32.mrf.mxu0
    %v326 = vadd.f32 0.0, %v325
    %v327 = vpop.f32.mrf.mxu0
    %v328 = vadd.f32 0.0, %v327
    %329 = vmatprep.mubr.f32.mxu0 %v98
    %330 = vmatmul.mubr.f32.gmra.mxu0 %v97
    %v331 = vpop.f32.mrf.mxu0
    %v332 = vadd.f32 0.0, %v331
    %v333 = vpop.f32.mrf.mxu0
    %v334 = vadd.f32 0.0, %v333
    %335 = vmatprep.mubr.f32.mxu0 %v100
    %336 = vmatmul.mubr.f32.gmra.mxu0 %v99
    %v337 = vpop.f32.mrf.mxu0
    %v338 = vadd.f32 0.0, %v337
    %v339 = vpop.f32.mrf.mxu0
    %v340 = vadd.f32 0.0, %v339
    %341 = vdwg.mxu0
    %342 = vmatprep.subr.mxu0 %v196
    %343 = vmatpush1.msra.mxu0 %v195
    %344 = vmatprep.subr.mxu0 %v194
    %345 = vmatpush1.msra.mxu0 %v193
    %346 = vmatprep.subr.mxu0 %v192
    %347 = vmatpush1.msra.mxu0 %v191
    %348 = vmatprep.subr.mxu0 %v190
    %349 = vmatpush1.msra.mxu0 %v189
    %350 = vmatprep.subr.mxu0 %v188
    %351 = vmatpush1.msra.mxu0 %v187
    %352 = vmatprep.subr.mxu0 %v186
    %353 = vmatpush1.msra.mxu0 %v185
    %354 = vmatprep.subr.mxu0 %v184
    %355 = vmatpush1.msra.mxu0 %v183
    %356 = vmatprep.subr.mxu0 %v182
    %357 = vmatpush1.msra.mxu0 %v181
    %358 = vmatprep.subr.mxu0 %v180
    %359 = vmatpush1.msra.mxu0 %v179
    %360 = vmatprep.subr.mxu0 %v178
    %361 = vmatpush1.msra.mxu0 %v177
    %362 = vmatprep.subr.mxu0 %v176
    %363 = vmatpush1.msra.mxu0 %v175
    %364 = vmatprep.subr.mxu0 %v174
    %365 = vmatpush1.msra.mxu0 %v173
    %366 = vmatprep.subr.mxu0 %v172
    %367 = vmatpush1.msra.mxu0 %v171
    %368 = vmatprep.subr.mxu0 %v170
    %369 = vmatpush1.msra.mxu0 %v169
    %370 = vmatprep.subr.mxu0 %v168
    %371 = vmatpush1.msra.mxu0 %v167
    %372 = vmatprep.subr.mxu0 %v166
    %373 = vmatpush1.msra.mxu0 %v165
    %374 = vmatprep.subr.mxu0 %v228
    %375 = vmatpush2.msra.mxu0 %v227
    %376 = vmatprep.subr.mxu0 %v226
    %377 = vmatpush2.msra.mxu0 %v225
    %378 = vmatprep.subr.mxu0 %v224
    %379 = vmatpush2.msra.mxu0 %v223
    %380 = vmatprep.subr.mxu0 %v222
    %381 = vmatpush2.msra.mxu0 %v221
    %382 = vmatprep.subr.mxu0 %v220
    %383 = vmatpush2.msra.mxu0 %v219
    %384 = vmatprep.subr.mxu0 %v218
    %385 = vmatpush2.msra.mxu0 %v217
    %386 = vmatprep.subr.mxu0 %v216
    %387 = vmatpush2.msra.mxu0 %v215
    %388 = vmatprep.subr.mxu0 %v214
    %389 = vmatpush2.msra.mxu0 %v213
    %390 = vmatprep.subr.mxu0 %v212
    %391 = vmatpush2.msra.mxu0 %v211
    %392 = vmatprep.subr.mxu0 %v210
    %393 = vmatpush2.msra.mxu0 %v209
    %394 = vmatprep.subr.mxu0 %v208
    %395 = vmatpush2.msra.mxu0 %v207
    %396 = vmatprep.subr.mxu0 %v206
    %397 = vmatpush2.msra.mxu0 %v205
    %398 = vmatprep.subr.mxu0 %v204
    %399 = vmatpush2.msra.mxu0 %v203
    %400 = vmatprep.subr.mxu0 %v202
    %401 = vmatpush2.msra.mxu0 %v201
    %402 = vmatprep.subr.mxu0 %v200
    %403 = vmatpush2.msra.mxu0 %v199
    %404 = vmatprep.subr.mxu0 %v198
    %405 = vmatpush2.msra.mxu0 %v197
    %406 = vmatprep.mubr.f32.mxu0 %v86
    %407 = vmatmul.mubr.f32.gmra.mxu0 %v85
    %v408 = vpop.f32.mrf.mxu0
    %v409 = vadd.f32 0.0, %v408
    %v410 = vpop.f32.mrf.mxu0
    %v411 = vadd.f32 0.0, %v410
    %412 = vmatprep.mubr.f32.mxu0 %v88
    %413 = vmatmul.mubr.f32.gmra.mxu0 %v87
    %v414 = vpop.f32.mrf.mxu0
    %v415 = vadd.f32 0.0, %v414
    %v416 = vpop.f32.mrf.mxu0
    %v417 = vadd.f32 0.0, %v416
    %418 = vmatprep.mubr.f32.mxu0 %v90
    %419 = vmatmul.mubr.f32.gmra.mxu0 %v89
    %v420 = vpop.f32.mrf.mxu0
    %v421 = vadd.f32 0.0, %v420
    %v422 = vpop.f32.mrf.mxu0
    %v423 = vadd.f32 0.0, %v422
    %424 = vmatprep.mubr.f32.mxu0 %v92
    %425 = vmatmul.mubr.f32.gmra.mxu0 %v91
    %v426 = vpop.f32.mrf.mxu0
    %v427 = vadd.f32 0.0, %v426
    %v428 = vpop.f32.mrf.mxu0
    %v429 = vadd.f32 0.0, %v428
    %430 = vmatprep.mubr.f32.mxu0 %v94
    %431 = vmatmul.mubr.f32.gmra.mxu0 %v93
    %v432 = vpop.f32.mrf.mxu0
    %v433 = vadd.f32 0.0, %v432
    %v434 = vpop.f32.mrf.mxu0
    %v435 = vadd.f32 0.0, %v434
    %436 = vmatprep.mubr.f32.mxu0 %v96
    %437 = vmatmul.mubr.f32.gmra.mxu0 %v95
    %v438 = vpop.f32.mrf.mxu0
    %v439 = vadd.f32 0.0, %v438
    %v440 = vpop.f32.mrf.mxu0
    %v441 = vadd.f32 0.0, %v440
    %442 = vmatprep.mubr.f32.mxu0 %v98
    %443 = vmatmul.mubr.f32.gmra.mxu0 %v97
    %v444 = vpop.f32.mrf.mxu0
    %v445 = vadd.f32 0.0, %v444
    %v446 = vpop.f32.mrf.mxu0
    %v447 = vadd.f32 0.0, %v446
    %448 = vmatprep.mubr.f32.mxu0 %v100
    %449 = vmatmul.mubr.f32.gmra.mxu0 %v99
    %v450 = vpop.f32.mrf.mxu0
    %v451 = vadd.f32 0.0, %v450
    %v452 = vpop.f32.mrf.mxu0
    %v453 = vadd.f32 0.0, %v452
    %454 = vdwg.mxu0
    %s455 = sld [smem:[#allocation2]]
    %v456 = vstv %s455
    %v457 = vmul.f32 %v85, %v456
    %v458 = vmul.f32 %v86, %v456
    %s459 = sld [smem:[#allocation2 + $0x1]]
    %v460 = vstv %s459
    %v461 = vmul.f32 %v87, %v460
    %v462 = vmul.f32 %v88, %v460
    %v463 = vadd.f32 %v457, %v461
    %v464 = vadd.f32 %v458, %v462
    %s465 = sld [smem:[#allocation2 + $0x2]]
    %v466 = vstv %s465
    %v467 = vmul.f32 %v89, %v466
    %v468 = vmul.f32 %v90, %v466
    %v469 = vadd.f32 %v463, %v467
    %v470 = vadd.f32 %v464, %v468
    %s471 = sld [smem:[#allocation2 + $0x3]]
    %v472 = vstv %s471
    %v473 = vmul.f32 %v91, %v472
    %v474 = vmul.f32 %v92, %v472
    %v475 = vadd.f32 %v469, %v473
    %v476 = vadd.f32 %v470, %v474
    %s477 = sld [smem:[#allocation7]]
    %v478 = vstv %s477
    %v479 = vadd.f32 %v475, %v478
    %v480 = vadd.f32 %v476, %v478
    %v481 = vmax.f32 %v479, 0.0
    %v482 = vmax.f32 %v480, 0.0
    %v483 = vmul.f32 %v296, %v481
    %v484 = vmul.f32 %v298, %v482
    %v485 = vmul.f32 %v409, %v481
    %v486 = vmul.f32 %v411, %v482
    %s487 = sld [smem:[#allocation2 + $0x10]]
    %v488 = vstv %s487
    %v489 = vmul.f32 %v93, %v488
    %v490 = vmul.f32 %v94, %v488
    %s491 = sld [smem:[#allocation2 + $0x11]]
    %v492 = vstv %s491
    %v493 = vmul.f32 %v95, %v492
    %v494 = vmul.f32 %v96, %v492
    %v495 = vadd.f32 %v489, %v493
    %v496 = vadd.f32 %v490, %v494
    %s497 = sld [smem:[#allocation2 + $0x12]]
    %v498 = vstv %s497
    %v499 = vmul.f32 %v97, %v498
    %v500 = vmul.f32 %v98, %v498
    %v501 = vadd.f32 %v495, %v499
    %v502 = vadd.f32 %v496, %v500
    %s503 = sld [smem:[#allocation2 + $0x13]]
    %v504 = vstv %s503
    %v505 = vmul.f32 %v99, %v504
    %v506 = vmul.f32 %v100, %v504
    %v507 = vadd.f32 %v501, %v505
    %v508 = vadd.f32 %v502, %v506
    %s509 = sld [smem:[#allocation7 + $0x4]]
    %v510 = vstv %s509
    %v511 = vadd.f32 %v507, %v510
    %v512 = vadd.f32 %v508, %v510
    %v513 = vmax.f32 %v511, 0.0
    %v514 = vmax.f32 %v512, 0.0
    %v515 = vmul.f32 %v320, %v513
    %v516 = vmul.f32 %v322, %v514
    %v517 = vmul.f32 %v433, %v513
    %v518 = vmul.f32 %v435, %v514
    %v519 = vadd.f32 %v483, %v515
    %v520 = vadd.f32 %v484, %v516
    %v521 = vadd.f32 %v485, %v517
    %v522 = vadd.f32 %v486, %v518
    %s523 = sld [smem:[#allocation2 + $0x4]]
    %v524 = vstv %s523
    %v525 = vmul.f32 %v85, %v524
    %v526 = vmul.f32 %v86, %v524
    %s527 = sld [smem:[#allocation2 + $0x5]]
    %v528 = vstv %s527
    %v529 = vmul.f32 %v87, %v528
    %v530 = vmul.f32 %v88, %v528
    %v531 = vadd.f32 %v525, %v529
    %v532 = vadd.f32 %v526, %v530
    %s533 = sld [smem:[#allocation2 + $0x6]]
    %v534 = vstv %s533
    %v535 = vmul.f32 %v89, %v534
    %v536 = vmul.f32 %v90, %v534
    %v537 = vadd.f32 %v531, %v535
    %v538 = vadd.f32 %v532, %v536
    %s539 = sld [smem:[#allocation2 + $0x7]]
    %v540 = vstv %s539
    %v541 = vmul.f32 %v91, %v540
    %v542 = vmul.f32 %v92, %v540
    %v543 = vadd.f32 %v537, %v541
    %v544 = vadd.f32 %v538, %v542
    %s545 = sld [smem:[#allocation7 + $0x1]]
    %v546 = vstv %s545
    %v547 = vadd.f32 %v543, %v546
    %v548 = vadd.f32 %v544, %v546
    %v549 = vmax.f32 %v547, 0.0
    %v550 = vmax.f32 %v548, 0.0
    %v551 = vmul.f32 %v302, %v549
    %v552 = vmul.f32 %v304, %v550
    %v553 = vmul.f32 %v415, %v549
    %v554 = vmul.f32 %v417, %v550
    %s555 = sld [smem:[#allocation2 + $0x14]]
    %v556 = vstv %s555
    %v557 = vmul.f32 %v93, %v556
    %v558 = vmul.f32 %v94, %v556
    %s559 = sld [smem:[#allocation2 + $0x15]]
    %v560 = vstv %s559
    %v561 = vmul.f32 %v95, %v560
    %v562 = vmul.f32 %v96, %v560
    %v563 = vadd.f32 %v557, %v561
    %v564 = vadd.f32 %v558, %v562
    %s565 = sld [smem:[#allocation2 + $0x16]]
    %v566 = vstv %s565
    %v567 = vmul.f32 %v97, %v566
    %v568 = vmul.f32 %v98, %v566
    %v569 = vadd.f32 %v563, %v567
    %v570 = vadd.f32 %v564, %v568
    %s571 = sld [smem:[#allocation2 + $0x17]]
    %v572 = vstv %s571
    %v573 = vmul.f32 %v99, %v572
    %v574 = vmul.f32 %v100, %v572
    %v575 = vadd.f32 %v569, %v573
    %v576 = vadd.f32 %v570, %v574
    %s577 = sld [smem:[#allocation7 + $0x5]]
    %v578 = vstv %s577
    %v579 = vadd.f32 %v575, %v578
    %v580 = vadd.f32 %v576, %v578
    %v581 = vmax.f32 %v579, 0.0
    %v582 = vmax.f32 %v580, 0.0
    %v583 = vmul.f32 %v326, %v581
    %v584 = vmul.f32 %v328, %v582
    %v585 = vmul.f32 %v439, %v581
    %v586 = vmul.f32 %v441, %v582
    %v587 = vadd.f32 %v551, %v583
    %v588 = vadd.f32 %v552, %v584
    %v589 = vadd.f32 %v553, %v585
    %v590 = vadd.f32 %v554, %v586
    %s591 = sld [smem:[#allocation2 + $0x8]]
    %v592 = vstv %s591
    %v593 = vmul.f32 %v85, %v592
    %v594 = vmul.f32 %v86, %v592
    %s595 = sld [smem:[#allocation2 + $0x9]]
    %v596 = vstv %s595
    %v597 = vmul.f32 %v87, %v596
    %v598 = vmul.f32 %v88, %v596
    %v599 = vadd.f32 %v593, %v597
    %v600 = vadd.f32 %v594, %v598
    %s601 = sld [smem:[#allocation2 + $0xa]]
    %v602 = vstv %s601
    %v603 = vmul.f32 %v89, %v602
    %v604 = vmul.f32 %v90, %v602
    %v605 = vadd.f32 %v599, %v603
    %v606 = vadd.f32 %v600, %v604
    %s607 = sld [smem:[#allocation2 + $0xb]]
    %v608 = vstv %s607
    %v609 = vmul.f32 %v91, %v608
    %v610 = vmul.f32 %v92, %v608
    %v611 = vadd.f32 %v605, %v609
    %v612 = vadd.f32 %v606, %v610
    %s613 = sld [smem:[#allocation7 + $0x2]]
    %v614 = vstv %s613
    %v615 = vadd.f32 %v611, %v614
    %v616 = vadd.f32 %v612, %v614
    %v617 = vmax.f32 %v615, 0.0
    %v618 = vmax.f32 %v616, 0.0
    %v619 = vmul.f32 %v308, %v617
    %v620 = vmul.f32 %v310, %v618
    %v621 = vmul.f32 %v421, %v617
    %v622 = vmul.f32 %v423, %v618
    %s623 = sld [smem:[#allocation2 + $0x18]]
    %v624 = vstv %s623
    %v625 = vmul.f32 %v93, %v624
    %v626 = vmul.f32 %v94, %v624
    %s627 = sld [smem:[#allocation2 + $0x19]]
    %v628 = vstv %s627
    %v629 = vmul.f32 %v95, %v628
    %v630 = vmul.f32 %v96, %v628
    %v631 = vadd.f32 %v625, %v629
    %v632 = vadd.f32 %v626, %v630
    %s633 = sld [smem:[#allocation2 + $0x1a]]
    %v634 = vstv %s633
    %v635 = vmul.f32 %v97, %v634
    %v636 = vmul.f32 %v98, %v634
    %v637 = vadd.f32 %v631, %v635
    %v638 = vadd.f32 %v632, %v636
    %s639 = sld [smem:[#allocation2 + $0x1b]]
    %v640 = vstv %s639
    %v641 = vmul.f32 %v99, %v640
    %v642 = vmul.f32 %v100, %v640
    %v643 = vadd.f32 %v637, %v641
    %v644 = vadd.f32 %v638, %v642
    %s645 = sld [smem:[#allocation7 + $0x6]]
    %v646 = vstv %s645
    %v647 = vadd.f32 %v643, %v646
    %v648 = vadd.f32 %v644, %v646
    %v649 = vmax.f32 %v647, 0.0
    %v650 = vmax.f32 %v648, 0.0
    %v651 = vmul.f32 %v332, %v649
    %v652 = vmul.f32 %v334, %v650
    %v653 = vmul.f32 %v445, %v649
    %v654 = vmul.f32 %v447, %v650
    %v655 = vadd.f32 %v619, %v651
    %v656 = vadd.f32 %v620, %v652
    %v657 = vadd.f32 %v621, %v653
    %v658 = vadd.f32 %v622, %v654
    %s659 = sld [smem:[#allocation2 + $0xc]]
    %v660 = vstv %s659
    %v661 = vmul.f32 %v85, %v660
    %v662 = vmul.f32 %v86, %v660
    %s663 = sld [smem:[#allocation2 + $0xd]]
    %v664 = vstv %s663
    %v665 = vmul.f32 %v87, %v664
    %v666 = vmul.f32 %v88, %v664
    %v667 = vadd.f32 %v661, %v665
    %v668 = vadd.f32 %v662, %v666
    %s669 = sld [smem:[#allocation2 + $0xe]]
    %v670 = vstv %s669
    %v671 = vmul.f32 %v89, %v670
    %v672 = vmul.f32 %v90, %v670
    %v673 = vadd.f32 %v667, %v671
    %v674 = vadd.f32 %v668, %v672
    %s675 = sld [smem:[#allocation2 + $0xf]]
    %v676 = vstv %s675
    %v677 = vmul.f32 %v91, %v676
    %v678 = vmul.f32 %v92, %v676
    %v679 = vadd.f32 %v673, %v677
    %v680 = vadd.f32 %v674, %v678
    %s681 = sld [smem:[#allocation7 + $0x3]]
    %v682 = vstv %s681
    %v683 = vadd.f32 %v679, %v682
    %v684 = vadd.f32 %v680, %v682
    %v685 = vmax.f32 %v683, 0.0
    %v686 = vmax.f32 %v684, 0.0
    %v687 = vmul.f32 %v314, %v685
    %v688 = vmul.f32 %v316, %v686
    %v689 = vmul.f32 %v427, %v685
    %v690 = vmul.f32 %v429, %v686
    %s691 = sld [smem:[#allocation2 + $0x1c]]
    %v692 = vstv %s691
    %v693 = vmul.f32 %v93, %v692
    %v694 = vmul.f32 %v94, %v692
    %s695 = sld [smem:[#allocation2 + $0x1d]]
    %v696 = vstv %s695
    %v697 = vmul.f32 %v95, %v696
    %v698 = vmul.f32 %v96, %v696
    %v699 = vadd.f32 %v693, %v697
    %v700 = vadd.f32 %v694, %v698
    %s701 = sld [smem:[#allocation2 + $0x1e]]
    %v702 = vstv %s701
    %v703 = vmul.f32 %v97, %v702
    %v704 = vmul.f32 %v98, %v702
    %v705 = vadd.f32 %v699, %v703
    %v706 = vadd.f32 %v700, %v704
    %s707 = sld [smem:[#allocation2 + $0x1f]]
    %v708 = vstv %s707
    %v709 = vmul.f32 %v99, %v708
    %v710 = vmul.f32 %v100, %v708
    %v711 = vadd.f32 %v705, %v709
    %v712 = vadd.f32 %v706, %v710
    %s713 = sld [smem:[#allocation7 + $0x7]]
    %v714 = vstv %s713
    %v715 = vadd.f32 %v711, %v714
    %v716 = vadd.f32 %v712, %v714
    %v717 = vmax.f32 %v715, 0.0
    %v718 = vmax.f32 %v716, 0.0
    %v719 = vmul.f32 %v338, %v717
    %v720 = vmul.f32 %v340, %v718
    %v721 = vmul.f32 %v451, %v717
    %v722 = vmul.f32 %v453, %v718
    %v723 = vadd.f32 %v687, %v719
    %v724 = vadd.f32 %v688, %v720
    %v725 = vadd.f32 %v689, %v721
    %v726 = vadd.f32 %v690, %v722
    %727 = vmatprep.subr.mxu0 %v196
    %728 = vmatpush1.msra.mxu0 %v195
    %729 = vmatprep.subr.mxu0 %v194
    %730 = vmatpush1.msra.mxu0 %v193
    %731 = vmatprep.subr.mxu0 %v192
    %732 = vmatpush1.msra.mxu0 %v191
    %733 = vmatprep.subr.mxu0 %v190
    %734 = vmatpush1.msra.mxu0 %v189
    %735 = vmatprep.subr.mxu0 %v188
    %736 = vmatpush1.msra.mxu0 %v187
    %737 = vmatprep.subr.mxu0 %v186
    %738 = vmatpush1.msra.mxu0 %v185
    %739 = vmatprep.subr.mxu0 %v184
    %740 = vmatpush1.msra.mxu0 %v183
    %741 = vmatprep.subr.mxu0 %v182
    %742 = vmatpush1.msra.mxu0 %v181
    %743 = vmatprep.subr.mxu0 %v180
    %744 = vmatpush1.msra.mxu0 %v179
    %745 = vmatprep.subr.mxu0 %v178
    %746 = vmatpush1.msra.mxu0 %v177
    %747 = vmatprep.subr.mxu0 %v176
    %748 = vmatpush1.msra.mxu0 %v175
    %749 = vmatprep.subr.mxu0 %v174
    %750 = vmatpush1.msra.mxu0 %v173
    %751 = vmatprep.subr.mxu0 %v172
    %752 = vmatpush1.msra.mxu0 %v171
    %753 = vmatprep.subr.mxu0 %v170
    %754 = vmatpush1.msra.mxu0 %v169
    %755 = vmatprep.subr.mxu0 %v168
    %756 = vmatpush1.msra.mxu0 %v167
    %757 = vmatprep.subr.mxu0 %v166
    %758 = vmatpush1.msra.mxu0 %v165
    %759 = vmatprep.subr.mxu0 %v228
    %760 = vmatpush2.msra.mxu0 %v227
    %761 = vmatprep.subr.mxu0 %v226
    %762 = vmatpush2.msra.mxu0 %v225
    %763 = vmatprep.subr.mxu0 %v224
    %764 = vmatpush2.msra.mxu0 %v223
    %765 = vmatprep.subr.mxu0 %v222
    %766 = vmatpush2.msra.mxu0 %v221
    %767 = vmatprep.subr.mxu0 %v220
    %768 = vmatpush2.msra.mxu0 %v219
    %769 = vmatprep.subr.mxu0 %v218
    %770 = vmatpush2.msra.mxu0 %v217
    %771 = vmatprep.subr.mxu0 %v216
    %772 = vmatpush2.msra.mxu0 %v215
    %773 = vmatprep.subr.mxu0 %v214
    %774 = vmatpush2.msra.mxu0 %v213
    %775 = vmatprep.subr.mxu0 %v212
    %776 = vmatpush2.msra.mxu0 %v211
    %777 = vmatprep.subr.mxu0 %v210
    %778 = vmatpush2.msra.mxu0 %v209
    %779 = vmatprep.subr.mxu0 %v208
    %780 = vmatpush2.msra.mxu0 %v207
    %781 = vmatprep.subr.mxu0 %v206
    %782 = vmatpush2.msra.mxu0 %v205
    %783 = vmatprep.subr.mxu0 %v204
    %784 = vmatpush2.msra.mxu0 %v203
    %785 = vmatprep.subr.mxu0 %v202
    %786 = vmatpush2.msra.mxu0 %v201
    %787 = vmatprep.subr.mxu0 %v200
    %788 = vmatpush2.msra.mxu0 %v199
    %789 = vmatprep.subr.mxu0 %v198
    %790 = vmatpush2.msra.mxu0 %v197
    %791 = vmatprep.mubr.f32.mxu0 %v522
    %792 = vmatmul.mubr.f32.gmra.mxu0 %v521
    %v793 = vpop.f32.mrf.mxu0
    %v794 = vadd.f32 0.0, %v793
    %v795 = vpop.f32.mrf.mxu0
    %v796 = vadd.f32 0.0, %v795
    %797 = vmatprep.mubr.f32.mxu0 %v590
    %798 = vmatmul.mubr.f32.gmra.mxu0 %v589
    %v799 = vpop.f32.mrf.mxu0
    %v800 = vadd.f32 0.0, %v799
    %v801 = vpop.f32.mrf.mxu0
    %v802 = vadd.f32 0.0, %v801
    %803 = vmatprep.mubr.f32.mxu0 %v658
    %804 = vmatmul.mubr.f32.gmra.mxu0 %v657
    %v805 = vpop.f32.mrf.mxu0
    %v806 = vadd.f32 0.0, %v805
    %v807 = vpop.f32.mrf.mxu0
    %v808 = vadd.f32 0.0, %v807
    %809 = vmatprep.mubr.f32.mxu0 %v726
    %810 = vmatmul.mubr.f32.gmra.mxu0 %v725
    %v811 = vpop.f32.mrf.mxu0
    %v812 = vadd.f32 0.0, %v811
    %v813 = vpop.f32.mrf.mxu0
    %v814 = vadd.f32 0.0, %v813
    %815 = vdwg.mxu0
    %816 = vmatprep.subr.mxu0 %v132
    %817 = vmatpush1.msra.mxu0 %v131
    %818 = vmatprep.subr.mxu0 %v130
    %819 = vmatpush1.msra.mxu0 %v129
    %820 = vmatprep.subr.mxu0 %v128
    %821 = vmatpush1.msra.mxu0 %v127
    %822 = vmatprep.subr.mxu0 %v126
    %823 = vmatpush1.msra.mxu0 %v125
    %824 = vmatprep.subr.mxu0 %v124
    %825 = vmatpush1.msra.mxu0 %v123
    %826 = vmatprep.subr.mxu0 %v122
    %827 = vmatpush1.msra.mxu0 %v121
    %828 = vmatprep.subr.mxu0 %v120
    %829 = vmatpush1.msra.mxu0 %v119
    %830 = vmatprep.subr.mxu0 %v118
    %831 = vmatpush1.msra.mxu0 %v117
    %832 = vmatprep.subr.mxu0 %v116
    %833 = vmatpush1.msra.mxu0 %v115
    %834 = vmatprep.subr.mxu0 %v114
    %835 = vmatpush1.msra.mxu0 %v113
    %836 = vmatprep.subr.mxu0 %v112
    %837 = vmatpush1.msra.mxu0 %v111
    %838 = vmatprep.subr.mxu0 %v110
    %839 = vmatpush1.msra.mxu0 %v109
    %840 = vmatprep.subr.mxu0 %v108
    %841 = vmatpush1.msra.mxu0 %v107
    %842 = vmatprep.subr.mxu0 %v106
    %843 = vmatpush1.msra.mxu0 %v105
    %844 = vmatprep.subr.mxu0 %v104
    %845 = vmatpush1.msra.mxu0 %v103
    %846 = vmatprep.subr.mxu0 %v102
    %847 = vmatpush1.msra.mxu0 %v101
    %848 = vmatprep.subr.mxu0 %v164
    %849 = vmatpush2.msra.mxu0 %v163
    %850 = vmatprep.subr.mxu0 %v162
    %851 = vmatpush2.msra.mxu0 %v161
    %852 = vmatprep.subr.mxu0 %v160
    %853 = vmatpush2.msra.mxu0 %v159
    %854 = vmatprep.subr.mxu0 %v158
    %855 = vmatpush2.msra.mxu0 %v157
    %856 = vmatprep.subr.mxu0 %v156
    %857 = vmatpush2.msra.mxu0 %v155
    %858 = vmatprep.subr.mxu0 %v154
    %859 = vmatpush2.msra.mxu0 %v153
    %860 = vmatprep.subr.mxu0 %v152
    %861 = vmatpush2.msra.mxu0 %v151
    %862 = vmatprep.subr.mxu0 %v150
    %863 = vmatpush2.msra.mxu0 %v149
    %864 = vmatprep.subr.mxu0 %v148
    %865 = vmatpush2.msra.mxu0 %v147
    %866 = vmatprep.subr.mxu0 %v146
    %867 = vmatpush2.msra.mxu0 %v145
    %868 = vmatprep.subr.mxu0 %v144
    %869 = vmatpush2.msra.mxu0 %v143
    %870 = vmatprep.subr.mxu0 %v142
    %871 = vmatpush2.msra.mxu0 %v141
    %872 = vmatprep.subr.mxu0 %v140
    %873 = vmatpush2.msra.mxu0 %v139
    %874 = vmatprep.subr.mxu0 %v138
    %875 = vmatpush2.msra.mxu0 %v137
    %876 = vmatprep.subr.mxu0 %v136
    %877 = vmatpush2.msra.mxu0 %v135
    %878 = vmatprep.subr.mxu0 %v134
    %879 = vmatpush2.msra.mxu0 %v133
    %880 = vmatprep.mubr.f32.mxu0 %v520
    %881 = vmatmul.mubr.f32.gmra.mxu0 %v519
    %v882 = vpop.f32.mrf.mxu0
    %v883 = vadd.f32 %v794, %v882
    %v884 = vpop.f32.mrf.mxu0
    %v885 = vadd.f32 %v796, %v884
    %886 = vmatprep.mubr.f32.mxu0 %v588
    %887 = vmatmul.mubr.f32.gmra.mxu0 %v587
    %v888 = vpop.f32.mrf.mxu0
    %v889 = vadd.f32 %v800, %v888
    %v890 = vpop.f32.mrf.mxu0
    %v891 = vadd.f32 %v802, %v890
    %892 = vmatprep.mubr.f32.mxu0 %v656
    %893 = vmatmul.mubr.f32.gmra.mxu0 %v655
    %v894 = vpop.f32.mrf.mxu0
    %v895 = vadd.f32 %v806, %v894
    %v896 = vpop.f32.mrf.mxu0
    %v897 = vadd.f32 %v808, %v896
    %898 = vmatprep.mubr.f32.mxu0 %v724
    %899 = vmatmul.mubr.f32.gmra.mxu0 %v723
    %v900 = vpop.f32.mrf.mxu0
    %v901 = vadd.f32 %v812, %v900
    %v902 = vpop.f32.mrf.mxu0
    %v903 = vadd.f32 %v814, %v902
    %904 = vdwg.mxu0
    %905 = vst [vmem:[#allocation12] sm:$0xff] %v883
    %906 = vst [vmem:[#allocation12 + $0x8] sm:$0xff] %v885
    %907 = vst [vmem:[#allocation12 + $0x10] sm:$0xff] %v889
    %908 = vst [vmem:[#allocation12 + $0x18] sm:$0xff] %v891
    %909 = vst [vmem:[#allocation12 + $0x20] sm:$0xff] %v895
    %910 = vst [vmem:[#allocation12 + $0x28] sm:$0xff] %v897
    %911 = vst [vmem:[#allocation12 + $0x30] sm:$0xff] %v901
    %912 = vst [vmem:[#allocation12 + $0x38] sm:$0xff] %v903
    // Predicated region
    $region42: #{tpu_custom_call.1} parent=1 // pred_check
      _
    $region43: #{tpu_custom_call.1} parent=1 // pred_check_branch
      %914 = sbr.rel (0) target = $region45
    $region44: #{tpu_custom_call.1} parent=1 // pred_region
      %s916 = ssub.s32 1024, 1024
      %917 = vsyncadd [#allocation4], %s916
      %s918 = sshll.u32 [#allocation12], 4
      %s919 = int_to_ptr.vmem [resolvable:$true] %s918
      %924 = dma.vmem_to_hbm [thread:$0]  %s919, 1024, %s5, [#allocation4], 256, 256, 16
    $region45: #{tpu_custom_call.1} parent=1 // pred_fallthru
      _
    // Predicated region
    $region46: #{tpu_custom_call.1} parent=1 // pred_check
      _
    $region47: #{tpu_custom_call.1} parent=1 // pred_check_branch
      %926 = sbr.rel (0) target = $region49
    $region48: #{tpu_custom_call.1} parent=1 // pred_region
      %927 = dma.done [#allocation4], 1024
    $region49: #{tpu_custom_call.1} parent=1 // pred_fallthru
      _
    %928 = vsyncpa [#allocation3], 1
    %929 = vsyncpa [#allocation10], 1
    %930 = vsyncpa [#allocation4], 1
    %931 = vsyncpa [#allocation5], 1
    %932 = vsyncpa [#allocation6], 1

</llo_original>
